<compile_context>
chip_gen: v7x
topology: tpu7x:2x2x1
jax: 0.10.0
libtpu: 0.0.40
codegen_flags: <defaults>
</compile_context>

<pallas_src>
import functools

import jax
import jax.numpy as jnp
from jax import lax
from jax.experimental import pallas as pl
from jax.experimental.pallas import tpu as pltpu

CIN, COUT, KH, KW = 3, 3, 3, 3
SUB = 8   # batch rows (one sublane group) processed per inner-loop chunk


def _round_up(x, m):
    return (x + m - 1) // m * m


def _cdiv(a, b):
    return -(-a // b)


def _make_kernel(H, W, BN):
    HW = H * W
    n_chunks = BN // SUB
    # Give the scheduler cross-chunk visibility without blowing up the already
    # fully unrolled 27-tap body.
    unroll = 2 if (n_chunks >= 2 and n_chunks % 2 == 0) else 1

    def kernel(w_ref, m_ref, x_ref, o_ref):
        # w_ref : SMEM (COUT*CIN*KH*KW,) f32, PyTorch (co,ci,kh,kw) row-major
        # m_ref : VMEM (KH*KW, SUB, HW)  f32, per-tap validity masks (resident)
        # x_ref : VMEM (BN, CIN*H*W)     f32, NCHW flattened per batch element
        # o_ref : VMEM (BN, COUT*H*W)    f32, == torch.flatten(conv(x), 1)

        def chunk_body(c, carry):
            r0 = pl.multiple_of(c * SUB, SUB)
            rows = pl.ds(r0, SUB)
            accs = [jnp.zeros((SUB, HW), jnp.float32) for _ in range(COUT)]
            for kh in range(KH):
                for kw in range(KW):
                    t = kh * KW + kw
                    d = (kh - 1) * W + (kw - 1)     # in-plane flat source shift
                    shift = (-d) % HW               # static non-negative roll
                    is_center = (kh == 1 and kw == 1)
                    # Center tap is valid everywhere -> skip mask load+multiply.
                    mask = None if is_center else m_ref[t]
                    for ci in range(CIN):
                        # Aligned (SUB, HW) load: ci*HW is a 128-lane multiple.
                        src = x_ref[rows, ci * HW:(ci + 1) * HW]
                        rolled = pltpu.roll(src, shift=shift, axis=1) if shift else src
                        # One shifted+masked tap, reused for all 3 output chans.
                        tap = rolled if mask is None else rolled * mask
                        for co in range(COUT):
                            w = w_ref[((co * CIN + ci) * KH + kh) * KW + kw]
                            accs[co] = accs[co] + tap * w
            # Lane-dense stores (HW multiple of 128 for CIFAR-like planes).
            for co in range(COUT):
                o_ref[rows, co * HW:(co + 1) * HW] = accs[co]
            return carry

        lax.fori_loop(0, n_chunks, chunk_body, 0, unroll=unroll)

    return kernel


def _tap_masks(H, W):
    """(KH*KW, SUB, HW) f32: 1 where the tap's source pixel lies inside the
    (zero-padded) HxW plane, 0 otherwise.  These zeros are exactly the
    positions whose rolled source wrapped around the plane or bled across a
    row, so roll+mask == shift-with-zero-padding."""
    HW = H * W
    pos = jnp.arange(HW, dtype=jnp.int32)
    yy, xx = pos // W, pos % W
    masks = []
    for kh in range(KH):
        for kw in range(KW):
            oy, ox = kh - 1, kw - 1
            valid = ((yy + oy >= 0) & (yy + oy < H)
                     & (xx + ox >= 0) & (xx + ox < W))
            masks.append(valid)
    m = jnp.stack(masks).astype(jnp.float32)                       # (9, HW)
    return jnp.broadcast_to(m[:, None, :], (KH * KW, SUB, HW))


def _choose_bn(N, block_n):
    """Pick the batch block so the grid has >= 2 (even) steps and padding is
    at most BN-1 rows (balanced steps instead of padding to a fixed 128)."""
    if N <= SUB:
        return SUB
    n_steps = max(2, _cdiv(N, block_n))
    if n_steps % 2:
        n_steps += 1          # even step count -> balanced v7x megacore split
    return _round_up(_cdiv(N, n_steps), SUB)


@functools.partial(jax.jit, static_argnames=("block_n",))
def client_net_forward(x, weight, *, block_n=64):
    """x: (N, 3, H, W) f32, weight: (3, 3, 3, 3) f32 -> (N, 3*H*W) f32."""
    N, C, H, W = x.shape
    assert C == CIN
    HW = H * W
    CHW = CIN * HW
    # Lane-density guarantee (CIFAR 32x32 -> 1024, demo 16x16 -> 256).
    assert HW % 128 == 0, "H*W must be a multiple of 128 for this kernel"

    BN = _choose_bn(N, block_n)
    N_pad = _round_up(N, BN)

    x_flat = x.reshape(N, CHW).astype(jnp.float32)   # metadata-only reshape
    if N_pad != N:
        x_flat = jnp.pad(x_flat, ((0, N_pad - N), (0, 0)))

    w_flat = weight.reshape(-1).astype(jnp.float32)
    masks = _tap_masks(H, W)

    out = pl.pallas_call(
        _make_kernel(H, W, BN),
        out_shape=jax.ShapeDtypeStruct((N_pad, COUT * HW), jnp.float32),
        grid_spec=pltpu.PrefetchScalarGridSpec(
            num_scalar_prefetch=0,
            grid=(N_pad // BN,),
            in_specs=[
                pl.BlockSpec(memory_space=pltpu.MemorySpace.SMEM),        # weights
                pl.BlockSpec((KH * KW, SUB, HW), lambda n: (0, 0, 0)),    # tap masks
                pl.BlockSpec((BN, CHW), lambda n: (n, 0)),                # input block
            ],
            out_specs=pl.BlockSpec((BN, COUT * HW), lambda n: (n, 0)),
        ),
        compiler_params=pltpu.CompilerParams(
            dimension_semantics=("parallel",),   # v7x: shard steps over both TCs
        ),
    )(w_flat, masks, x_flat)

    return out[:N] if N_pad != N else out


def _reference(x, weight):
    return lax.conv_general_dilated(
        x, weight, window_strides=(1, 1), padding="SAME",
        dimension_numbers=("NCHW", "OIHW", "NCHW"),
    ).reshape(x.shape[0], -1)


if __name__ == "__main__":
    key = jax.random.PRNGKey(0)
    kx, kw_key, kx2 = jax.random.split(key, 3)

    # Small demo shapes consistent with the module (CIFAR-style 3xHxW).
    N, H, W = 2, 16, 16
    x = jax.random.normal(kx, (N, CIN, H, W), dtype=jnp.float32)
    weight = jax.random.normal(kw_key, (COUT, CIN, KH, KW), dtype=jnp.float32) * 0.1

    out = client_net_forward(x, weight)
    out = jax.block_until_ready(out)
    ref = _reference(x, weight)
    assert out.shape == (N, CIN * H * W), out.shape
    assert jnp.allclose(out, ref, atol=1e-4, rtol=1e-4), "mismatch vs lax conv reference"

    # Second check: multi-step grid (2 steps), multi-chunk inner loop with
    # unroll=2, and the ragged batch-padding path (N=20 -> BN=16, N_pad=32).
    N2 = 20
    x2 = jax.random.normal(kx2, (N2, CIN, H, W), dtype=jnp.float32)
    out2 = jax.block_until_ready(client_net_forward(x2, weight))
    ref2 = _reference(x2, weight)
    assert out2.shape == (N2, CIN * H * W), out2.shape
    assert jnp.allclose(out2, ref2, atol=1e-4, rtol=1e-4), "mismatch (batched path)"

    print("KERNEL_OK")
</pallas_src>

<mosaic_0001>
module attributes {stable_mosaic.version = 11 : i64} {
  func.func @kernel(%arg0: i32, %arg1: memref<81xf32, #tpu.memory_space<smem>>, %arg2: memref<9x8x256xf32, #tpu.memory_space<vmem>>, %arg3: memref<8x768xf32, #tpu.memory_space<vmem>>, %arg4: memref<8x768xf32, #tpu.memory_space<vmem>>) attributes {dimension_semantics = [#tpu.dimension_semantics<parallel>], iteration_bounds = array<i64: 1>, scalar_prefetch = 0 : i64, scratch_operands = 0 : i64, tpu.core_type = #tpu.core_type<tc>, window_params = [{transform_indices = @transform_0, window_bounds = array<i64: 81>}, {pipeline_mode = #tpu.pipeline_mode<synchronous>, transform_indices = @transform_1, window_bounds = array<i64: 9, 8, 256>}, {transform_indices = @transform_2, window_bounds = array<i64: 8, 768>}, {transform_indices = @transform_3, window_bounds = array<i64: 8, 768>}]} {
    %c0_i32 = arith.constant 0 : i32
    %c8_i32 = arith.constant 8 : i32
    %0 = arith.muli %c0_i32, %c8_i32 : i32
    %1 = tpu.assume_multiple %0, 8 : i32
    %cst = arith.constant 0.000000e+00 : f32
    %2 = vector.broadcast %cst : f32 to vector<8x256xf32>
    %cst_0 = arith.constant 0.000000e+00 : f32
    %3 = vector.broadcast %cst_0 : f32 to vector<8x256xf32>
    %cst_1 = arith.constant 0.000000e+00 : f32
    %4 = vector.broadcast %cst_1 : f32 to vector<8x256xf32>
    %c0 = arith.constant 0 : index
    %c0_2 = arith.constant 0 : index
    %c0_3 = arith.constant 0 : index
    %5 = vector.load %arg2[%c0, %c0_2, %c0_3] : memref<9x8x256xf32, #tpu.memory_space<vmem>>, vector<1x8x256xf32>
    %6 = vector.shape_cast %5 : vector<1x8x256xf32> to vector<8x256xf32>
    %7 = arith.index_cast %1 : i32 to index
    %c0_4 = arith.constant 0 : index
    %8 = vector.load %arg3[%7, %c0_4] : memref<8x768xf32, #tpu.memory_space<vmem>>, vector<8x256xf32>
    %c17_i32 = arith.constant 17 : i32
    %9 = tpu.dynamic_rotate %8 by %c17_i32 dim 1 : vector<8x256xf32>, i32 -> vector<8x256xf32>
    %10 = arith.mulf %9, %6 : vector<8x256xf32>
    %c0_5 = arith.constant 0 : index
    %11 = memref.load %arg1[%c0_5] : memref<81xf32, #tpu.memory_space<smem>>
    %12 = vector.broadcast %11 : f32 to vector<8x256xf32>
    %13 = arith.mulf %10, %12 : vector<8x256xf32>
    %14 = arith.addf %2, %13 : vector<8x256xf32>
    %c27 = arith.constant 27 : index
    %15 = memref.load %arg1[%c27] : memref<81xf32, #tpu.memory_space<smem>>
    %16 = vector.broadcast %15 : f32 to vector<8x256xf32>
    %17 = arith.mulf %10, %16 : vector<8x256xf32>
    %18 = arith.addf %3, %17 : vector<8x256xf32>
    %c54 = arith.constant 54 : index
    %19 = memref.load %arg1[%c54] : memref<81xf32, #tpu.memory_space<smem>>
    %20 = vector.broadcast %19 : f32 to vector<8x256xf32>
    %21 = arith.mulf %10, %20 : vector<8x256xf32>
    %22 = arith.addf %4, %21 : vector<8x256xf32>
    %23 = arith.index_cast %1 : i32 to index
    %c256 = arith.constant 256 : index
    %24 = vector.load %arg3[%23, %c256] : memref<8x768xf32, #tpu.memory_space<vmem>>, vector<8x256xf32>
    %c17_i32_6 = arith.constant 17 : i32
    %25 = tpu.dynamic_rotate %24 by %c17_i32_6 dim 1 : vector<8x256xf32>, i32 -> vector<8x256xf32>
    %26 = arith.mulf %25, %6 : vector<8x256xf32>
    %c9 = arith.constant 9 : index
    %27 = memref.load %arg1[%c9] : memref<81xf32, #tpu.memory_space<smem>>
    %28 = vector.broadcast %27 : f32 to vector<8x256xf32>
    %29 = arith.mulf %26, %28 : vector<8x256xf32>
    %30 = arith.addf %14, %29 : vector<8x256xf32>
    %c36 = arith.constant 36 : index
    %31 = memref.load %arg1[%c36] : memref<81xf32, #tpu.memory_space<smem>>
    %32 = vector.broadcast %31 : f32 to vector<8x256xf32>
    %33 = arith.mulf %26, %32 : vector<8x256xf32>
    %34 = arith.addf %18, %33 : vector<8x256xf32>
    %c63 = arith.constant 63 : index
    %35 = memref.load %arg1[%c63] : memref<81xf32, #tpu.memory_space<smem>>
    %36 = vector.broadcast %35 : f32 to vector<8x256xf32>
    %37 = arith.mulf %26, %36 : vector<8x256xf32>
    %38 = arith.addf %22, %37 : vector<8x256xf32>
    %39 = arith.index_cast %1 : i32 to index
    %c512 = arith.constant 512 : index
    %40 = vector.load %arg3[%39, %c512] : memref<8x768xf32, #tpu.memory_space<vmem>>, vector<8x256xf32>
    %c17_i32_7 = arith.constant 17 : i32
    %41 = tpu.dynamic_rotate %40 by %c17_i32_7 dim 1 : vector<8x256xf32>, i32 -> vector<8x256xf32>
    %42 = arith.mulf %41, %6 : vector<8x256xf32>
    %c18 = arith.constant 18 : index
    %43 = memref.load %arg1[%c18] : memref<81xf32, #tpu.memory_space<smem>>
    %44 = vector.broadcast %43 : f32 to vector<8x256xf32>
    %45 = arith.mulf %42, %44 : vector<8x256xf32>
    %46 = arith.addf %30, %45 : vector<8x256xf32>
    %c45 = arith.constant 45 : index
    %47 = memref.load %arg1[%c45] : memref<81xf32, #tpu.memory_space<smem>>
    %48 = vector.broadcast %47 : f32 to vector<8x256xf32>
    %49 = arith.mulf %42, %48 : vector<8x256xf32>
    %50 = arith.addf %34, %49 : vector<8x256xf32>
    %c72 = arith.constant 72 : index
    %51 = memref.load %arg1[%c72] : memref<81xf32, #tpu.memory_space<smem>>
    %52 = vector.broadcast %51 : f32 to vector<8x256xf32>
    %53 = arith.mulf %42, %52 : vector<8x256xf32>
    %54 = arith.addf %38, %53 : vector<8x256xf32>
    %c1 = arith.constant 1 : index
    %c0_8 = arith.constant 0 : index
    %c0_9 = arith.constant 0 : index
    %55 = vector.load %arg2[%c1, %c0_8, %c0_9] : memref<9x8x256xf32, #tpu.memory_space<vmem>>, vector<1x8x256xf32>
    %56 = vector.shape_cast %55 : vector<1x8x256xf32> to vector<8x256xf32>
    %57 = arith.index_cast %1 : i32 to index
    %c0_10 = arith.constant 0 : index
    %58 = vector.load %arg3[%57, %c0_10] : memref<8x768xf32, #tpu.memory_space<vmem>>, vector<8x256xf32>
    %c16_i32 = arith.constant 16 : i32
    %59 = tpu.dynamic_rotate %58 by %c16_i32 dim 1 : vector<8x256xf32>, i32 -> vector<8x256xf32>
    %60 = arith.mulf %59, %56 : vector<8x256xf32>
    %c1_11 = arith.constant 1 : index
    %61 = memref.load %arg1[%c1_11] : memref<81xf32, #tpu.memory_space<smem>>
    %62 = vector.broadcast %61 : f32 to vector<8x256xf32>
    %63 = arith.mulf %60, %62 : vector<8x256xf32>
    %64 = arith.addf %46, %63 : vector<8x256xf32>
    %c28 = arith.constant 28 : index
    %65 = memref.load %arg1[%c28] : memref<81xf32, #tpu.memory_space<smem>>
    %66 = vector.broadcast %65 : f32 to vector<8x256xf32>
    %67 = arith.mulf %60, %66 : vector<8x256xf32>
    %68 = arith.addf %50, %67 : vector<8x256xf32>
    %c55 = arith.constant 55 : index
    %69 = memref.load %arg1[%c55] : memref<81xf32, #tpu.memory_space<smem>>
    %70 = vector.broadcast %69 : f32 to vector<8x256xf32>
    %71 = arith.mulf %60, %70 : vector<8x256xf32>
    %72 = arith.addf %54, %71 : vector<8x256xf32>
    %73 = arith.index_cast %1 : i32 to index
    %c256_12 = arith.constant 256 : index
    %74 = vector.load %arg3[%73, %c256_12] : memref<8x768xf32, #tpu.memory_space<vmem>>, vector<8x256xf32>
    %c16_i32_13 = arith.constant 16 : i32
    %75 = tpu.dynamic_rotate %74 by %c16_i32_13 dim 1 : vector<8x256xf32>, i32 -> vector<8x256xf32>
    %76 = arith.mulf %75, %56 : vector<8x256xf32>
    %c10 = arith.constant 10 : index
    %77 = memref.load %arg1[%c10] : memref<81xf32, #tpu.memory_space<smem>>
    %78 = vector.broadcast %77 : f32 to vector<8x256xf32>
    %79 = arith.mulf %76, %78 : vector<8x256xf32>
    %80 = arith.addf %64, %79 : vector<8x256xf32>
    %c37 = arith.constant 37 : index
    %81 = memref.load %arg1[%c37] : memref<81xf32, #tpu.memory_space<smem>>
    %82 = vector.broadcast %81 : f32 to vector<8x256xf32>
    %83 = arith.mulf %76, %82 : vector<8x256xf32>
    %84 = arith.addf %68, %83 : vector<8x256xf32>
    %c64 = arith.constant 64 : index
    %85 = memref.load %arg1[%c64] : memref<81xf32, #tpu.memory_space<smem>>
    %86 = vector.broadcast %85 : f32 to vector<8x256xf32>
    %87 = arith.mulf %76, %86 : vector<8x256xf32>
    %88 = arith.addf %72, %87 : vector<8x256xf32>
    %89 = arith.index_cast %1 : i32 to index
    %c512_14 = arith.constant 512 : index
    %90 = vector.load %arg3[%89, %c512_14] : memref<8x768xf32, #tpu.memory_space<vmem>>, vector<8x256xf32>
    %c16_i32_15 = arith.constant 16 : i32
    %91 = tpu.dynamic_rotate %90 by %c16_i32_15 dim 1 : vector<8x256xf32>, i32 -> vector<8x256xf32>
    %92 = arith.mulf %91, %56 : vector<8x256xf32>
    %c19 = arith.constant 19 : index
    %93 = memref.load %arg1[%c19] : memref<81xf32, #tpu.memory_space<smem>>
    %94 = vector.broadcast %93 : f32 to vector<8x256xf32>
    %95 = arith.mulf %92, %94 : vector<8x256xf32>
    %96 = arith.addf %80, %95 : vector<8x256xf32>
    %c46 = arith.constant 46 : index
    %97 = memref.load %arg1[%c46] : memref<81xf32, #tpu.memory_space<smem>>
    %98 = vector.broadcast %97 : f32 to vector<8x256xf32>
    %99 = arith.mulf %92, %98 : vector<8x256xf32>
    %100 = arith.addf %84, %99 : vector<8x256xf32>
    %c73 = arith.constant 73 : index
    %101 = memref.load %arg1[%c73] : memref<81xf32, #tpu.memory_space<smem>>
    %102 = vector.broadcast %101 : f32 to vector<8x256xf32>
    %103 = arith.mulf %92, %102 : vector<8x256xf32>
    %104 = arith.addf %88, %103 : vector<8x256xf32>
    %c2 = arith.constant 2 : index
    %c0_16 = arith.constant 0 : index
    %c0_17 = arith.constant 0 : index
    %105 = vector.load %arg2[%c2, %c0_16, %c0_17] : memref<9x8x256xf32, #tpu.memory_space<vmem>>, vector<1x8x256xf32>
    %106 = vector.shape_cast %105 : vector<1x8x256xf32> to vector<8x256xf32>
    %107 = arith.index_cast %1 : i32 to index
    %c0_18 = arith.constant 0 : index
    %108 = vector.load %arg3[%107, %c0_18] : memref<8x768xf32, #tpu.memory_space<vmem>>, vector<8x256xf32>
    %c15_i32 = arith.constant 15 : i32
    %109 = tpu.dynamic_rotate %108 by %c15_i32 dim 1 : vector<8x256xf32>, i32 -> vector<8x256xf32>
    %110 = arith.mulf %109, %106 : vector<8x256xf32>
    %c2_19 = arith.constant 2 : index
    %111 = memref.load %arg1[%c2_19] : memref<81xf32, #tpu.memory_space<smem>>
    %112 = vector.broadcast %111 : f32 to vector<8x256xf32>
    %113 = arith.mulf %110, %112 : vector<8x256xf32>
    %114 = arith.addf %96, %113 : vector<8x256xf32>
    %c29 = arith.constant 29 : index
    %115 = memref.load %arg1[%c29] : memref<81xf32, #tpu.memory_space<smem>>
    %116 = vector.broadcast %115 : f32 to vector<8x256xf32>
    %117 = arith.mulf %110, %116 : vector<8x256xf32>
    %118 = arith.addf %100, %117 : vector<8x256xf32>
    %c56 = arith.constant 56 : index
    %119 = memref.load %arg1[%c56] : memref<81xf32, #tpu.memory_space<smem>>
    %120 = vector.broadcast %119 : f32 to vector<8x256xf32>
    %121 = arith.mulf %110, %120 : vector<8x256xf32>
    %122 = arith.addf %104, %121 : vector<8x256xf32>
    %123 = arith.index_cast %1 : i32 to index
    %c256_20 = arith.constant 256 : index
    %124 = vector.load %arg3[%123, %c256_20] : memref<8x768xf32, #tpu.memory_space<vmem>>, vector<8x256xf32>
    %c15_i32_21 = arith.constant 15 : i32
    %125 = tpu.dynamic_rotate %124 by %c15_i32_21 dim 1 : vector<8x256xf32>, i32 -> vector<8x256xf32>
    %126 = arith.mulf %125, %106 : vector<8x256xf32>
    %c11 = arith.constant 11 : index
    %127 = memref.load %arg1[%c11] : memref<81xf32, #tpu.memory_space<smem>>
    %128 = vector.broadcast %127 : f32 to vector<8x256xf32>
    %129 = arith.mulf %126, %128 : vector<8x256xf32>
    %130 = arith.addf %114, %129 : vector<8x256xf32>
    %c38 = arith.constant 38 : index
    %131 = memref.load %arg1[%c38] : memref<81xf32, #tpu.memory_space<smem>>
    %132 = vector.broadcast %131 : f32 to vector<8x256xf32>
    %133 = arith.mulf %126, %132 : vector<8x256xf32>
    %134 = arith.addf %118, %133 : vector<8x256xf32>
    %c65 = arith.constant 65 : index
    %135 = memref.load %arg1[%c65] : memref<81xf32, #tpu.memory_space<smem>>
    %136 = vector.broadcast %135 : f32 to vector<8x256xf32>
    %137 = arith.mulf %126, %136 : vector<8x256xf32>
    %138 = arith.addf %122, %137 : vector<8x256xf32>
    %139 = arith.index_cast %1 : i32 to index
    %c512_22 = arith.constant 512 : index
    %140 = vector.load %arg3[%139, %c512_22] : memref<8x768xf32, #tpu.memory_space<vmem>>, vector<8x256xf32>
    %c15_i32_23 = arith.constant 15 : i32
    %141 = tpu.dynamic_rotate %140 by %c15_i32_23 dim 1 : vector<8x256xf32>, i32 -> vector<8x256xf32>
    %142 = arith.mulf %141, %106 : vector<8x256xf32>
    %c20 = arith.constant 20 : index
    %143 = memref.load %arg1[%c20] : memref<81xf32, #tpu.memory_space<smem>>
    %144 = vector.broadcast %143 : f32 to vector<8x256xf32>
    %145 = arith.mulf %142, %144 : vector<8x256xf32>
    %146 = arith.addf %130, %145 : vector<8x256xf32>
    %c47 = arith.constant 47 : index
    %147 = memref.load %arg1[%c47] : memref<81xf32, #tpu.memory_space<smem>>
    %148 = vector.broadcast %147 : f32 to vector<8x256xf32>
    %149 = arith.mulf %142, %148 : vector<8x256xf32>
    %150 = arith.addf %134, %149 : vector<8x256xf32>
    %c74 = arith.constant 74 : index
    %151 = memref.load %arg1[%c74] : memref<81xf32, #tpu.memory_space<smem>>
    %152 = vector.broadcast %151 : f32 to vector<8x256xf32>
    %153 = arith.mulf %142, %152 : vector<8x256xf32>
    %154 = arith.addf %138, %153 : vector<8x256xf32>
    %c3 = arith.constant 3 : index
    %c0_24 = arith.constant 0 : index
    %c0_25 = arith.constant 0 : index
    %155 = vector.load %arg2[%c3, %c0_24, %c0_25] : memref<9x8x256xf32, #tpu.memory_space<vmem>>, vector<1x8x256xf32>
    %156 = vector.shape_cast %155 : vector<1x8x256xf32> to vector<8x256xf32>
    %157 = arith.index_cast %1 : i32 to index
    %c0_26 = arith.constant 0 : index
    %158 = vector.load %arg3[%157, %c0_26] : memref<8x768xf32, #tpu.memory_space<vmem>>, vector<8x256xf32>
    %c1_i32 = arith.constant 1 : i32
    %159 = tpu.dynamic_rotate %158 by %c1_i32 dim 1 : vector<8x256xf32>, i32 -> vector<8x256xf32>
    %160 = arith.mulf %159, %156 : vector<8x256xf32>
    %c3_27 = arith.constant 3 : index
    %161 = memref.load %arg1[%c3_27] : memref<81xf32, #tpu.memory_space<smem>>
    %162 = vector.broadcast %161 : f32 to vector<8x256xf32>
    %163 = arith.mulf %160, %162 : vector<8x256xf32>
    %164 = arith.addf %146, %163 : vector<8x256xf32>
    %c30 = arith.constant 30 : index
    %165 = memref.load %arg1[%c30] : memref<81xf32, #tpu.memory_space<smem>>
    %166 = vector.broadcast %165 : f32 to vector<8x256xf32>
    %167 = arith.mulf %160, %166 : vector<8x256xf32>
    %168 = arith.addf %150, %167 : vector<8x256xf32>
    %c57 = arith.constant 57 : index
    %169 = memref.load %arg1[%c57] : memref<81xf32, #tpu.memory_space<smem>>
    %170 = vector.broadcast %169 : f32 to vector<8x256xf32>
    %171 = arith.mulf %160, %170 : vector<8x256xf32>
    %172 = arith.addf %154, %171 : vector<8x256xf32>
    %173 = arith.index_cast %1 : i32 to index
    %c256_28 = arith.constant 256 : index
    %174 = vector.load %arg3[%173, %c256_28] : memref<8x768xf32, #tpu.memory_space<vmem>>, vector<8x256xf32>
    %c1_i32_29 = arith.constant 1 : i32
    %175 = tpu.dynamic_rotate %174 by %c1_i32_29 dim 1 : vector<8x256xf32>, i32 -> vector<8x256xf32>
    %176 = arith.mulf %175, %156 : vector<8x256xf32>
    %c12 = arith.constant 12 : index
    %177 = memref.load %arg1[%c12] : memref<81xf32, #tpu.memory_space<smem>>
    %178 = vector.broadcast %177 : f32 to vector<8x256xf32>
    %179 = arith.mulf %176, %178 : vector<8x256xf32>
    %180 = arith.addf %164, %179 : vector<8x256xf32>
    %c39 = arith.constant 39 : index
    %181 = memref.load %arg1[%c39] : memref<81xf32, #tpu.memory_space<smem>>
    %182 = vector.broadcast %181 : f32 to vector<8x256xf32>
    %183 = arith.mulf %176, %182 : vector<8x256xf32>
    %184 = arith.addf %168, %183 : vector<8x256xf32>
    %c66 = arith.constant 66 : index
    %185 = memref.load %arg1[%c66] : memref<81xf32, #tpu.memory_space<smem>>
    %186 = vector.broadcast %185 : f32 to vector<8x256xf32>
    %187 = arith.mulf %176, %186 : vector<8x256xf32>
    %188 = arith.addf %172, %187 : vector<8x256xf32>
    %189 = arith.index_cast %1 : i32 to index
    %c512_30 = arith.constant 512 : index
    %190 = vector.load %arg3[%189, %c512_30] : memref<8x768xf32, #tpu.memory_space<vmem>>, vector<8x256xf32>
    %c1_i32_31 = arith.constant 1 : i32
    %191 = tpu.dynamic_rotate %190 by %c1_i32_31 dim 1 : vector<8x256xf32>, i32 -> vector<8x256xf32>
    %192 = arith.mulf %191, %156 : vector<8x256xf32>
    %c21 = arith.constant 21 : index
    %193 = memref.load %arg1[%c21] : memref<81xf32, #tpu.memory_space<smem>>
    %194 = vector.broadcast %193 : f32 to vector<8x256xf32>
    %195 = arith.mulf %192, %194 : vector<8x256xf32>
    %196 = arith.addf %180, %195 : vector<8x256xf32>
    %c48 = arith.constant 48 : index
    %197 = memref.load %arg1[%c48] : memref<81xf32, #tpu.memory_space<smem>>
    %198 = vector.broadcast %197 : f32 to vector<8x256xf32>
    %199 = arith.mulf %192, %198 : vector<8x256xf32>
    %200 = arith.addf %184, %199 : vector<8x256xf32>
    %c75 = arith.constant 75 : index
    %201 = memref.load %arg1[%c75] : memref<81xf32, #tpu.memory_space<smem>>
    %202 = vector.broadcast %201 : f32 to vector<8x256xf32>
    %203 = arith.mulf %192, %202 : vector<8x256xf32>
    %204 = arith.addf %188, %203 : vector<8x256xf32>
    %205 = arith.index_cast %1 : i32 to index
    %c0_32 = arith.constant 0 : index
    %206 = vector.load %arg3[%205, %c0_32] : memref<8x768xf32, #tpu.memory_space<vmem>>, vector<8x256xf32>
    %c4 = arith.constant 4 : index
    %207 = memref.load %arg1[%c4] : memref<81xf32, #tpu.memory_space<smem>>
    %208 = vector.broadcast %207 : f32 to vector<8x256xf32>
    %209 = arith.mulf %206, %208 : vector<8x256xf32>
    %210 = arith.addf %196, %209 : vector<8x256xf32>
    %c31 = arith.constant 31 : index
    %211 = memref.load %arg1[%c31] : memref<81xf32, #tpu.memory_space<smem>>
    %212 = vector.broadcast %211 : f32 to vector<8x256xf32>
    %213 = arith.mulf %206, %212 : vector<8x256xf32>
    %214 = arith.addf %200, %213 : vector<8x256xf32>
    %c58 = arith.constant 58 : index
    %215 = memref.load %arg1[%c58] : memref<81xf32, #tpu.memory_space<smem>>
    %216 = vector.broadcast %215 : f32 to vector<8x256xf32>
    %217 = arith.mulf %206, %216 : vector<8x256xf32>
    %218 = arith.addf %204, %217 : vector<8x256xf32>
    %219 = arith.index_cast %1 : i32 to index
    %c256_33 = arith.constant 256 : index
    %220 = vector.load %arg3[%219, %c256_33] : memref<8x768xf32, #tpu.memory_space<vmem>>, vector<8x256xf32>
    %c13 = arith.constant 13 : index
    %221 = memref.load %arg1[%c13] : memref<81xf32, #tpu.memory_space<smem>>
    %222 = vector.broadcast %221 : f32 to vector<8x256xf32>
    %223 = arith.mulf %220, %222 : vector<8x256xf32>
    %224 = arith.addf %210, %223 : vector<8x256xf32>
    %c40 = arith.constant 40 : index
    %225 = memref.load %arg1[%c40] : memref<81xf32, #tpu.memory_space<smem>>
    %226 = vector.broadcast %225 : f32 to vector<8x256xf32>
    %227 = arith.mulf %220, %226 : vector<8x256xf32>
    %228 = arith.addf %214, %227 : vector<8x256xf32>
    %c67 = arith.constant 67 : index
    %229 = memref.load %arg1[%c67] : memref<81xf32, #tpu.memory_space<smem>>
    %230 = vector.broadcast %229 : f32 to vector<8x256xf32>
    %231 = arith.mulf %220, %230 : vector<8x256xf32>
    %232 = arith.addf %218, %231 : vector<8x256xf32>
    %233 = arith.index_cast %1 : i32 to index
    %c512_34 = arith.constant 512 : index
    %234 = vector.load %arg3[%233, %c512_34] : memref<8x768xf32, #tpu.memory_space<vmem>>, vector<8x256xf32>
    %c22 = arith.constant 22 : index
    %235 = memref.load %arg1[%c22] : memref<81xf32, #tpu.memory_space<smem>>
    %236 = vector.broadcast %235 : f32 to vector<8x256xf32>
    %237 = arith.mulf %234, %236 : vector<8x256xf32>
    %238 = arith.addf %224, %237 : vector<8x256xf32>
    %c49 = arith.constant 49 : index
    %239 = memref.load %arg1[%c49] : memref<81xf32, #tpu.memory_space<smem>>
    %240 = vector.broadcast %239 : f32 to vector<8x256xf32>
    %241 = arith.mulf %234, %240 : vector<8x256xf32>
    %242 = arith.addf %228, %241 : vector<8x256xf32>
    %c76 = arith.constant 76 : index
    %243 = memref.load %arg1[%c76] : memref<81xf32, #tpu.memory_space<smem>>
    %244 = vector.broadcast %243 : f32 to vector<8x256xf32>
    %245 = arith.mulf %234, %244 : vector<8x256xf32>
    %246 = arith.addf %232, %245 : vector<8x256xf32>
    %c5 = arith.constant 5 : index
    %c0_35 = arith.constant 0 : index
    %c0_36 = arith.constant 0 : index
    %247 = vector.load %arg2[%c5, %c0_35, %c0_36] : memref<9x8x256xf32, #tpu.memory_space<vmem>>, vector<1x8x256xf32>
    %248 = vector.shape_cast %247 : vector<1x8x256xf32> to vector<8x256xf32>
    %249 = arith.index_cast %1 : i32 to index
    %c0_37 = arith.constant 0 : index
    %250 = vector.load %arg3[%249, %c0_37] : memref<8x768xf32, #tpu.memory_space<vmem>>, vector<8x256xf32>
    %c255_i32 = arith.constant 255 : i32
    %251 = tpu.dynamic_rotate %250 by %c255_i32 dim 1 : vector<8x256xf32>, i32 -> vector<8x256xf32>
    %252 = arith.mulf %251, %248 : vector<8x256xf32>
    %c5_38 = arith.constant 5 : index
    %253 = memref.load %arg1[%c5_38] : memref<81xf32, #tpu.memory_space<smem>>
    %254 = vector.broadcast %253 : f32 to vector<8x256xf32>
    %255 = arith.mulf %252, %254 : vector<8x256xf32>
    %256 = arith.addf %238, %255 : vector<8x256xf32>
    %c32 = arith.constant 32 : index
    %257 = memref.load %arg1[%c32] : memref<81xf32, #tpu.memory_space<smem>>
    %258 = vector.broadcast %257 : f32 to vector<8x256xf32>
    %259 = arith.mulf %252, %258 : vector<8x256xf32>
    %260 = arith.addf %242, %259 : vector<8x256xf32>
    %c59 = arith.constant 59 : index
    %261 = memref.load %arg1[%c59] : memref<81xf32, #tpu.memory_space<smem>>
    %262 = vector.broadcast %261 : f32 to vector<8x256xf32>
    %263 = arith.mulf %252, %262 : vector<8x256xf32>
    %264 = arith.addf %246, %263 : vector<8x256xf32>
    %265 = arith.index_cast %1 : i32 to index
    %c256_39 = arith.constant 256 : index
    %266 = vector.load %arg3[%265, %c256_39] : memref<8x768xf32, #tpu.memory_space<vmem>>, vector<8x256xf32>
    %c255_i32_40 = arith.constant 255 : i32
    %267 = tpu.dynamic_rotate %266 by %c255_i32_40 dim 1 : vector<8x256xf32>, i32 -> vector<8x256xf32>
    %268 = arith.mulf %267, %248 : vector<8x256xf32>
    %c14 = arith.constant 14 : index
    %269 = memref.load %arg1[%c14] : memref<81xf32, #tpu.memory_space<smem>>
    %270 = vector.broadcast %269 : f32 to vector<8x256xf32>
    %271 = arith.mulf %268, %270 : vector<8x256xf32>
    %272 = arith.addf %256, %271 : vector<8x256xf32>
    %c41 = arith.constant 41 : index
    %273 = memref.load %arg1[%c41] : memref<81xf32, #tpu.memory_space<smem>>
    %274 = vector.broadcast %273 : f32 to vector<8x256xf32>
    %275 = arith.mulf %268, %274 : vector<8x256xf32>
    %276 = arith.addf %260, %275 : vector<8x256xf32>
    %c68 = arith.constant 68 : index
    %277 = memref.load %arg1[%c68] : memref<81xf32, #tpu.memory_space<smem>>
    %278 = vector.broadcast %277 : f32 to vector<8x256xf32>
    %279 = arith.mulf %268, %278 : vector<8x256xf32>
    %280 = arith.addf %264, %279 : vector<8x256xf32>
    %281 = arith.index_cast %1 : i32 to index
    %c512_41 = arith.constant 512 : index
    %282 = vector.load %arg3[%281, %c512_41] : memref<8x768xf32, #tpu.memory_space<vmem>>, vector<8x256xf32>
    %c255_i32_42 = arith.constant 255 : i32
    %283 = tpu.dynamic_rotate %282 by %c255_i32_42 dim 1 : vector<8x256xf32>, i32 -> vector<8x256xf32>
    %284 = arith.mulf %283, %248 : vector<8x256xf32>
    %c23 = arith.constant 23 : index
    %285 = memref.load %arg1[%c23] : memref<81xf32, #tpu.memory_space<smem>>
    %286 = vector.broadcast %285 : f32 to vector<8x256xf32>
    %287 = arith.mulf %284, %286 : vector<8x256xf32>
    %288 = arith.addf %272, %287 : vector<8x256xf32>
    %c50 = arith.constant 50 : index
    %289 = memref.load %arg1[%c50] : memref<81xf32, #tpu.memory_space<smem>>
    %290 = vector.broadcast %289 : f32 to vector<8x256xf32>
    %291 = arith.mulf %284, %290 : vector<8x256xf32>
    %292 = arith.addf %276, %291 : vector<8x256xf32>
    %c77 = arith.constant 77 : index
    %293 = memref.load %arg1[%c77] : memref<81xf32, #tpu.memory_space<smem>>
    %294 = vector.broadcast %293 : f32 to vector<8x256xf32>
    %295 = arith.mulf %284, %294 : vector<8x256xf32>
    %296 = arith.addf %280, %295 : vector<8x256xf32>
    %c6 = arith.constant 6 : index
    %c0_43 = arith.constant 0 : index
    %c0_44 = arith.constant 0 : index
    %297 = vector.load %arg2[%c6, %c0_43, %c0_44] : memref<9x8x256xf32, #tpu.memory_space<vmem>>, vector<1x8x256xf32>
    %298 = vector.shape_cast %297 : vector<1x8x256xf32> to vector<8x256xf32>
    %299 = arith.index_cast %1 : i32 to index
    %c0_45 = arith.constant 0 : index
    %300 = vector.load %arg3[%299, %c0_45] : memref<8x768xf32, #tpu.memory_space<vmem>>, vector<8x256xf32>
    %c241_i32 = arith.constant 241 : i32
    %301 = tpu.dynamic_rotate %300 by %c241_i32 dim 1 : vector<8x256xf32>, i32 -> vector<8x256xf32>
    %302 = arith.mulf %301, %298 : vector<8x256xf32>
    %c6_46 = arith.constant 6 : index
    %303 = memref.load %arg1[%c6_46] : memref<81xf32, #tpu.memory_space<smem>>
    %304 = vector.broadcast %303 : f32 to vector<8x256xf32>
    %305 = arith.mulf %302, %304 : vector<8x256xf32>
    %306 = arith.addf %288, %305 : vector<8x256xf32>
    %c33 = arith.constant 33 : index
    %307 = memref.load %arg1[%c33] : memref<81xf32, #tpu.memory_space<smem>>
    %308 = vector.broadcast %307 : f32 to vector<8x256xf32>
    %309 = arith.mulf %302, %308 : vector<8x256xf32>
    %310 = arith.addf %292, %309 : vector<8x256xf32>
    %c60 = arith.constant 60 : index
    %311 = memref.load %arg1[%c60] : memref<81xf32, #tpu.memory_space<smem>>
    %312 = vector.broadcast %311 : f32 to vector<8x256xf32>
    %313 = arith.mulf %302, %312 : vector<8x256xf32>
    %314 = arith.addf %296, %313 : vector<8x256xf32>
    %315 = arith.index_cast %1 : i32 to index
    %c256_47 = arith.constant 256 : index
    %316 = vector.load %arg3[%315, %c256_47] : memref<8x768xf32, #tpu.memory_space<vmem>>, vector<8x256xf32>
    %c241_i32_48 = arith.constant 241 : i32
    %317 = tpu.dynamic_rotate %316 by %c241_i32_48 dim 1 : vector<8x256xf32>, i32 -> vector<8x256xf32>
    %318 = arith.mulf %317, %298 : vector<8x256xf32>
    %c15 = arith.constant 15 : index
    %319 = memref.load %arg1[%c15] : memref<81xf32, #tpu.memory_space<smem>>
    %320 = vector.broadcast %319 : f32 to vector<8x256xf32>
    %321 = arith.mulf %318, %320 : vector<8x256xf32>
    %322 = arith.addf %306, %321 : vector<8x256xf32>
    %c42 = arith.constant 42 : index
    %323 = memref.load %arg1[%c42] : memref<81xf32, #tpu.memory_space<smem>>
    %324 = vector.broadcast %323 : f32 to vector<8x256xf32>
    %325 = arith.mulf %318, %324 : vector<8x256xf32>
    %326 = arith.addf %310, %325 : vector<8x256xf32>
    %c69 = arith.constant 69 : index
    %327 = memref.load %arg1[%c69] : memref<81xf32, #tpu.memory_space<smem>>
    %328 = vector.broadcast %327 : f32 to vector<8x256xf32>
    %329 = arith.mulf %318, %328 : vector<8x256xf32>
    %330 = arith.addf %314, %329 : vector<8x256xf32>
    %331 = arith.index_cast %1 : i32 to index
    %c512_49 = arith.constant 512 : index
    %332 = vector.load %arg3[%331, %c512_49] : memref<8x768xf32, #tpu.memory_space<vmem>>, vector<8x256xf32>
    %c241_i32_50 = arith.constant 241 : i32
    %333 = tpu.dynamic_rotate %332 by %c241_i32_50 dim 1 : vector<8x256xf32>, i32 -> vector<8x256xf32>
    %334 = arith.mulf %333, %298 : vector<8x256xf32>
    %c24 = arith.constant 24 : index
    %335 = memref.load %arg1[%c24] : memref<81xf32, #tpu.memory_space<smem>>
    %336 = vector.broadcast %335 : f32 to vector<8x256xf32>
    %337 = arith.mulf %334, %336 : vector<8x256xf32>
    %338 = arith.addf %322, %337 : vector<8x256xf32>
    %c51 = arith.constant 51 : index
    %339 = memref.load %arg1[%c51] : memref<81xf32, #tpu.memory_space<smem>>
    %340 = vector.broadcast %339 : f32 to vector<8x256xf32>
    %341 = arith.mulf %334, %340 : vector<8x256xf32>
    %342 = arith.addf %326, %341 : vector<8x256xf32>
    %c78 = arith.constant 78 : index
    %343 = memref.load %arg1[%c78] : memref<81xf32, #tpu.memory_space<smem>>
    %344 = vector.broadcast %343 : f32 to vector<8x256xf32>
    %345 = arith.mulf %334, %344 : vector<8x256xf32>
    %346 = arith.addf %330, %345 : vector<8x256xf32>
    %c7 = arith.constant 7 : index
    %c0_51 = arith.constant 0 : index
    %c0_52 = arith.constant 0 : index
    %347 = vector.load %arg2[%c7, %c0_51, %c0_52] : memref<9x8x256xf32, #tpu.memory_space<vmem>>, vector<1x8x256xf32>
    %348 = vector.shape_cast %347 : vector<1x8x256xf32> to vector<8x256xf32>
    %349 = arith.index_cast %1 : i32 to index
    %c0_53 = arith.constant 0 : index
    %350 = vector.load %arg3[%349, %c0_53] : memref<8x768xf32, #tpu.memory_space<vmem>>, vector<8x256xf32>
    %c240_i32 = arith.constant 240 : i32
    %351 = tpu.dynamic_rotate %350 by %c240_i32 dim 1 : vector<8x256xf32>, i32 -> vector<8x256xf32>
    %352 = arith.mulf %351, %348 : vector<8x256xf32>
    %c7_54 = arith.constant 7 : index
    %353 = memref.load %arg1[%c7_54] : memref<81xf32, #tpu.memory_space<smem>>
    %354 = vector.broadcast %353 : f32 to vector<8x256xf32>
    %355 = arith.mulf %352, %354 : vector<8x256xf32>
    %356 = arith.addf %338, %355 : vector<8x256xf32>
    %c34 = arith.constant 34 : index
    %357 = memref.load %arg1[%c34] : memref<81xf32, #tpu.memory_space<smem>>
    %358 = vector.broadcast %357 : f32 to vector<8x256xf32>
    %359 = arith.mulf %352, %358 : vector<8x256xf32>
    %360 = arith.addf %342, %359 : vector<8x256xf32>
    %c61 = arith.constant 61 : index
    %361 = memref.load %arg1[%c61] : memref<81xf32, #tpu.memory_space<smem>>
    %362 = vector.broadcast %361 : f32 to vector<8x256xf32>
    %363 = arith.mulf %352, %362 : vector<8x256xf32>
    %364 = arith.addf %346, %363 : vector<8x256xf32>
    %365 = arith.index_cast %1 : i32 to index
    %c256_55 = arith.constant 256 : index
    %366 = vector.load %arg3[%365, %c256_55] : memref<8x768xf32, #tpu.memory_space<vmem>>, vector<8x256xf32>
    %c240_i32_56 = arith.constant 240 : i32
    %367 = tpu.dynamic_rotate %366 by %c240_i32_56 dim 1 : vector<8x256xf32>, i32 -> vector<8x256xf32>
    %368 = arith.mulf %367, %348 : vector<8x256xf32>
    %c16 = arith.constant 16 : index
    %369 = memref.load %arg1[%c16] : memref<81xf32, #tpu.memory_space<smem>>
    %370 = vector.broadcast %369 : f32 to vector<8x256xf32>
    %371 = arith.mulf %368, %370 : vector<8x256xf32>
    %372 = arith.addf %356, %371 : vector<8x256xf32>
    %c43 = arith.constant 43 : index
    %373 = memref.load %arg1[%c43] : memref<81xf32, #tpu.memory_space<smem>>
    %374 = vector.broadcast %373 : f32 to vector<8x256xf32>
    %375 = arith.mulf %368, %374 : vector<8x256xf32>
    %376 = arith.addf %360, %375 : vector<8x256xf32>
    %c70 = arith.constant 70 : index
    %377 = memref.load %arg1[%c70] : memref<81xf32, #tpu.memory_space<smem>>
    %378 = vector.broadcast %377 : f32 to vector<8x256xf32>
    %379 = arith.mulf %368, %378 : vector<8x256xf32>
    %380 = arith.addf %364, %379 : vector<8x256xf32>
    %381 = arith.index_cast %1 : i32 to index
    %c512_57 = arith.constant 512 : index
    %382 = vector.load %arg3[%381, %c512_57] : memref<8x768xf32, #tpu.memory_space<vmem>>, vector<8x256xf32>
    %c240_i32_58 = arith.constant 240 : i32
    %383 = tpu.dynamic_rotate %382 by %c240_i32_58 dim 1 : vector<8x256xf32>, i32 -> vector<8x256xf32>
    %384 = arith.mulf %383, %348 : vector<8x256xf32>
    %c25 = arith.constant 25 : index
    %385 = memref.load %arg1[%c25] : memref<81xf32, #tpu.memory_space<smem>>
    %386 = vector.broadcast %385 : f32 to vector<8x256xf32>
    %387 = arith.mulf %384, %386 : vector<8x256xf32>
    %388 = arith.addf %372, %387 : vector<8x256xf32>
    %c52 = arith.constant 52 : index
    %389 = memref.load %arg1[%c52] : memref<81xf32, #tpu.memory_space<smem>>
    %390 = vector.broadcast %389 : f32 to vector<8x256xf32>
    %391 = arith.mulf %384, %390 : vector<8x256xf32>
    %392 = arith.addf %376, %391 : vector<8x256xf32>
    %c79 = arith.constant 79 : index
    %393 = memref.load %arg1[%c79] : memref<81xf32, #tpu.memory_space<smem>>
    %394 = vector.broadcast %393 : f32 to vector<8x256xf32>
    %395 = arith.mulf %384, %394 : vector<8x256xf32>
    %396 = arith.addf %380, %395 : vector<8x256xf32>
    %c8 = arith.constant 8 : index
    %c0_59 = arith.constant 0 : index
    %c0_60 = arith.constant 0 : index
    %397 = vector.load %arg2[%c8, %c0_59, %c0_60] : memref<9x8x256xf32, #tpu.memory_space<vmem>>, vector<1x8x256xf32>
    %398 = vector.shape_cast %397 : vector<1x8x256xf32> to vector<8x256xf32>
    %399 = arith.index_cast %1 : i32 to index
    %c0_61 = arith.constant 0 : index
    %400 = vector.load %arg3[%399, %c0_61] : memref<8x768xf32, #tpu.memory_space<vmem>>, vector<8x256xf32>
    %c239_i32 = arith.constant 239 : i32
    %401 = tpu.dynamic_rotate %400 by %c239_i32 dim 1 : vector<8x256xf32>, i32 -> vector<8x256xf32>
    %402 = arith.mulf %401, %398 : vector<8x256xf32>
    %c8_62 = arith.constant 8 : index
    %403 = memref.load %arg1[%c8_62] : memref<81xf32, #tpu.memory_space<smem>>
    %404 = vector.broadcast %403 : f32 to vector<8x256xf32>
    %405 = arith.mulf %402, %404 : vector<8x256xf32>
    %406 = arith.addf %388, %405 : vector<8x256xf32>
    %c35 = arith.constant 35 : index
    %407 = memref.load %arg1[%c35] : memref<81xf32, #tpu.memory_space<smem>>
    %408 = vector.broadcast %407 : f32 to vector<8x256xf32>
    %409 = arith.mulf %402, %408 : vector<8x256xf32>
    %410 = arith.addf %392, %409 : vector<8x256xf32>
    %c62 = arith.constant 62 : index
    %411 = memref.load %arg1[%c62] : memref<81xf32, #tpu.memory_space<smem>>
    %412 = vector.broadcast %411 : f32 to vector<8x256xf32>
    %413 = arith.mulf %402, %412 : vector<8x256xf32>
    %414 = arith.addf %396, %413 : vector<8x256xf32>
    %415 = arith.index_cast %1 : i32 to index
    %c256_63 = arith.constant 256 : index
    %416 = vector.load %arg3[%415, %c256_63] : memref<8x768xf32, #tpu.memory_space<vmem>>, vector<8x256xf32>
    %c239_i32_64 = arith.constant 239 : i32
    %417 = tpu.dynamic_rotate %416 by %c239_i32_64 dim 1 : vector<8x256xf32>, i32 -> vector<8x256xf32>
    %418 = arith.mulf %417, %398 : vector<8x256xf32>
    %c17 = arith.constant 17 : index
    %419 = memref.load %arg1[%c17] : memref<81xf32, #tpu.memory_space<smem>>
    %420 = vector.broadcast %419 : f32 to vector<8x256xf32>
    %421 = arith.mulf %418, %420 : vector<8x256xf32>
    %422 = arith.addf %406, %421 : vector<8x256xf32>
    %c44 = arith.constant 44 : index
    %423 = memref.load %arg1[%c44] : memref<81xf32, #tpu.memory_space<smem>>
    %424 = vector.broadcast %423 : f32 to vector<8x256xf32>
    %425 = arith.mulf %418, %424 : vector<8x256xf32>
    %426 = arith.addf %410, %425 : vector<8x256xf32>
    %c71 = arith.constant 71 : index
    %427 = memref.load %arg1[%c71] : memref<81xf32, #tpu.memory_space<smem>>
    %428 = vector.broadcast %427 : f32 to vector<8x256xf32>
    %429 = arith.mulf %418, %428 : vector<8x256xf32>
    %430 = arith.addf %414, %429 : vector<8x256xf32>
    %431 = arith.index_cast %1 : i32 to index
    %c512_65 = arith.constant 512 : index
    %432 = vector.load %arg3[%431, %c512_65] : memref<8x768xf32, #tpu.memory_space<vmem>>, vector<8x256xf32>
    %c239_i32_66 = arith.constant 239 : i32
    %433 = tpu.dynamic_rotate %432 by %c239_i32_66 dim 1 : vector<8x256xf32>, i32 -> vector<8x256xf32>
    %434 = arith.mulf %433, %398 : vector<8x256xf32>
    %c26 = arith.constant 26 : index
    %435 = memref.load %arg1[%c26] : memref<81xf32, #tpu.memory_space<smem>>
    %436 = vector.broadcast %435 : f32 to vector<8x256xf32>
    %437 = arith.mulf %434, %436 : vector<8x256xf32>
    %438 = arith.addf %422, %437 : vector<8x256xf32>
    %c53 = arith.constant 53 : index
    %439 = memref.load %arg1[%c53] : memref<81xf32, #tpu.memory_space<smem>>
    %440 = vector.broadcast %439 : f32 to vector<8x256xf32>
    %441 = arith.mulf %434, %440 : vector<8x256xf32>
    %442 = arith.addf %426, %441 : vector<8x256xf32>
    %c80 = arith.constant 80 : index
    %443 = memref.load %arg1[%c80] : memref<81xf32, #tpu.memory_space<smem>>
    %444 = vector.broadcast %443 : f32 to vector<8x256xf32>
    %445 = arith.mulf %434, %444 : vector<8x256xf32>
    %446 = arith.addf %430, %445 : vector<8x256xf32>
    %447 = arith.index_cast %1 : i32 to index
    %c0_67 = arith.constant 0 : index
    %448 = vector.load %arg4[%447, %c0_67] : memref<8x768xf32, #tpu.memory_space<vmem>>, vector<8x256xf32>
    tpu.vector_store %arg4[%447, %c0_67], %438 {strides = array<i32>} : memref<8x768xf32, #tpu.memory_space<vmem>>, vector<8x256xf32>,
    %449 = arith.index_cast %1 : i32 to index
    %c256_68 = arith.constant 256 : index
    %450 = vector.load %arg4[%449, %c256_68] : memref<8x768xf32, #tpu.memory_space<vmem>>, vector<8x256xf32>
    tpu.vector_store %arg4[%449, %c256_68], %442 {strides = array<i32>} : memref<8x768xf32, #tpu.memory_space<vmem>>, vector<8x256xf32>,
    %451 = arith.index_cast %1 : i32 to index
    %c512_69 = arith.constant 512 : index
    %452 = vector.load %arg4[%451, %c512_69] : memref<8x768xf32, #tpu.memory_space<vmem>>, vector<8x256xf32>
    tpu.vector_store %arg4[%451, %c512_69], %446 {strides = array<i32>} : memref<8x768xf32, #tpu.memory_space<vmem>>, vector<8x256xf32>,
    %c1_i32_70 = arith.constant 1 : i32
    return
  }
  func.func @transform_0(%arg0: i32) -> i32 {
    %c0_i32 = arith.constant 0 : i32
    %c0_i32_0 = arith.constant 0 : i32
    return %c0_i32 : i32
  }
  func.func @transform_1(%arg0: i32) -> (i32, i32, i32) {
    %c0_i32 = arith.constant 0 : i32
    %c0_i32_0 = arith.constant 0 : i32
    %c0_i32_1 = arith.constant 0 : i32
    %c0_i32_2 = arith.constant 0 : i32
    return %c0_i32, %c0_i32_0, %c0_i32_1 : i32, i32, i32
  }
  func.func @transform_2(%arg0: i32) -> (i32, i32) {
    %c0_i32 = arith.constant 0 : i32
    %c0_i32_0 = arith.constant 0 : i32
    return %arg0, %c0_i32 : i32, i32
  }
  func.func @transform_3(%arg0: i32) -> (i32, i32) {
    %c0_i32 = arith.constant 0 : i32
    %c0_i32_0 = arith.constant 0 : i32
    return %arg0, %c0_i32 : i32, i32
  }
}

</mosaic_0001>

<llo_original>
// kernel: client_net_forward.1
$region0: #{client_net_forward.1}
  #allocation0 [shape = 'u32[]', space=smem, size = 0x4, offset = 0x4, fixed_abs, tag = 'smem constant byte address 0x4 - core index']
  #allocation1 [shape = 'u32[144,128]{1,0:T(1,128)}', space=vmem, size = 0x12000, scoped, tag = 'internal scratch']
  %s0 = inlined_call_operand.vmem [shape: f32[81], index: 0, kind: input, shape index: {}]
  %s1 = inlined_call_operand.vmem [shape: f32[9,8,256], index: 1, kind: input, shape index: {}]
  %s2 = inlined_call_operand.vmem [shape: f32[8,768], index: 2, kind: input, shape index: {}]
  %s3 = inlined_call_operand.vmem [shape: f32[8,768], index: 3, kind: output, shape index: {}]
  %s4 = sld [smem:[#allocation0]]
  $region26: #{client_net_forward.1} parent=0
    _
  %s6 = ssub.s32 1, %s4
  %s7 = scalar_select 0, %s6, %s4
  $region1: #{client_net_forward.1} parent=0
    #allocation2 [shape = 'u8[512]{0}', space=smem, size = 0x200, scoped, tag = 'input window, operand 0, single buffered']
    #allocation3 [shape = 's32[1]{0}', space=sflag, size = 0x4, scoped, tag = 'scoped memory for client_net_forward.1']
    %8 = vsyncpa [#allocation3], 0
    // Predicated region
    $region2: #{client_net_forward.1} parent=1 // pred_check
      _
    $region3: #{client_net_forward.1} parent=1 // pred_check_branch
      %10 = sbr.rel (0) target = $region5
    $region4: #{client_net_forward.1} parent=1 // pred_region
      %s12 = ssub.s32 16, 16
      %13 = vsyncadd [#allocation3], %s12
      %s15 = sshll.u32 %s0, 4
      %s16 = int_to_ptr.vmem [resolvable:$true] %s15
      %18 = dma.vmem_to_smem %s16, 16, [#allocation2], [#allocation3]
    $region5: #{client_net_forward.1} parent=1 // pred_fallthru
      _
    // Predicated region
    $region6: #{client_net_forward.1} parent=1 // pred_check
      _
    $region7: #{client_net_forward.1} parent=1 // pred_check_branch
      %20 = sbr.rel (0) target = $region9
    $region8: #{client_net_forward.1} parent=1 // pred_region
      _
    $region9: #{client_net_forward.1} parent=1 // pred_fallthru
      _
    // Predicated region
    $region10: #{client_net_forward.1} parent=1 // pred_check
      _
    $region11: #{client_net_forward.1} parent=1 // pred_check_branch
      %22 = sbr.rel (0) target = $region13
    $region12: #{client_net_forward.1} parent=1 // pred_region
      _
    $region13: #{client_net_forward.1} parent=1 // pred_fallthru
      _
    // Predicated region
    $region14: #{client_net_forward.1} parent=1 // pred_check
      _
    $region15: #{client_net_forward.1} parent=1 // pred_check_branch
      %24 = sbr.rel (0) target = $region17
    $region16: #{client_net_forward.1} parent=1 // pred_region
      %25 = dma.done [#allocation3], 16
    $region17: #{client_net_forward.1} parent=1 // pred_fallthru
      _
    %26 = sfence
    %v27 = vld [vmem:[%s1] sm:$0xff]
    %v28 = vld [vmem:[%s1 + $0x8] sm:$0xff]
    %s29 = smul.u32 0, 6
    %s30 = smul.addr %s29, 8
    %s31 = scalar_lea.vmem %s2, %s30
    %v32 = vld [vmem:[%s31] sm:$0xff]
    %v33 = vld [vmem:[%s31 + $0x8] sm:$0xff]
    %34 = vrot.lane.b32.xlu0 %v32, 17
    %v35 = vpop.permute.xlu0 %34
    %36 = vrot.lane.b32.xlu0 %v33, 17
    %v37 = vpop.permute.xlu0 %36
    %v38 = vlaneseq
    %v39 = vand.u32 %v38, 127
    %vm40 = vcmp.lt.s32.totalorder %v39, 17
    %v41 = vsel %vm40, %v35, %v37
    %v42 = vsel %vm40, %v37, %v35
    %v43 = vmul.f32 %v42, %v27
    %v44 = vmul.f32 %v41, %v28
    %s45 = sld [smem:[#allocation2]]
    %v46 = vstv %s45
    %v47 = vmul.f32 %v43, %v46
    %v48 = vmul.f32 %v44, %v46
    %v49 = vadd.f32 %v47, 0.0
    %v50 = vadd.f32 %v48, 0.0
    %s51 = sld [smem:[#allocation2 + $0x1b]]
    %v52 = vstv %s51
    %v53 = vmul.f32 %v43, %v52
    %v54 = vmul.f32 %v44, %v52
    %v55 = vadd.f32 %v53, 0.0
    %v56 = vadd.f32 %v54, 0.0
    %s57 = sld [smem:[#allocation2 + $0x36]]
    %v58 = vstv %s57
    %v59 = vmul.f32 %v43, %v58
    %v60 = vmul.f32 %v44, %v58
    %v61 = vadd.f32 %v59, 0.0
    %v62 = vadd.f32 %v60, 0.0
    %v63 = vld [vmem:[%s31 + $0x10] sm:$0xff]
    %v64 = vld [vmem:[%s31 + $0x18] sm:$0xff]
    %65 = vrot.lane.b32.xlu0 %v63, 17
    %v66 = vpop.permute.xlu0 %65
    %67 = vrot.lane.b32.xlu0 %v64, 17
    %v68 = vpop.permute.xlu0 %67
    %v69 = vsel %vm40, %v66, %v68
    %v70 = vsel %vm40, %v68, %v66
    %v71 = vmul.f32 %v70, %v27
    %v72 = vmul.f32 %v69, %v28
    %s73 = sld [smem:[#allocation2 + $0x9]]
    %v74 = vstv %s73
    %v75 = vmul.f32 %v71, %v74
    %v76 = vmul.f32 %v72, %v74
    %v77 = vadd.f32 %v49, %v75
    %v78 = vadd.f32 %v50, %v76
    %s79 = sld [smem:[#allocation2 + $0x24]]
    %v80 = vstv %s79
    %v81 = vmul.f32 %v71, %v80
    %v82 = vmul.f32 %v72, %v80
    %v83 = vadd.f32 %v55, %v81
    %v84 = vadd.f32 %v56, %v82
    %s85 = sld [smem:[#allocation2 + $0x3f]]
    %v86 = vstv %s85
    %v87 = vmul.f32 %v71, %v86
    %v88 = vmul.f32 %v72, %v86
    %v89 = vadd.f32 %v61, %v87
    %v90 = vadd.f32 %v62, %v88
    %v91 = vld [vmem:[%s31 + $0x20] sm:$0xff]
    %v92 = vld [vmem:[%s31 + $0x28] sm:$0xff]
    %93 = vrot.lane.b32.xlu0 %v91, 17
    %v94 = vpop.permute.xlu0 %93
    %95 = vrot.lane.b32.xlu0 %v92, 17
    %v96 = vpop.permute.xlu0 %95
    %v97 = vsel %vm40, %v94, %v96
    %v98 = vsel %vm40, %v96, %v94
    %v99 = vmul.f32 %v98, %v27
    %v100 = vmul.f32 %v97, %v28
    %s101 = sld [smem:[#allocation2 + $0x12]]
    %v102 = vstv %s101
    %v103 = vmul.f32 %v99, %v102
    %v104 = vmul.f32 %v100, %v102
    %v105 = vadd.f32 %v77, %v103
    %v106 = vadd.f32 %v78, %v104
    %s107 = sld [smem:[#allocation2 + $0x2d]]
    %v108 = vstv %s107
    %v109 = vmul.f32 %v99, %v108
    %v110 = vmul.f32 %v100, %v108
    %v111 = vadd.f32 %v83, %v109
    %v112 = vadd.f32 %v84, %v110
    %s113 = sld [smem:[#allocation2 + $0x48]]
    %v114 = vstv %s113
    %v115 = vmul.f32 %v99, %v114
    %v116 = vmul.f32 %v100, %v114
    %v117 = vadd.f32 %v89, %v115
    %v118 = vadd.f32 %v90, %v116
    %s119 = scalar_lea.vmem %s1, 16
    %v120 = vld [vmem:[%s119] sm:$0xff]
    %v121 = vld [vmem:[%s119 + $0x8] sm:$0xff]
    %122 = vrot.lane.b32.xlu0 %v32, 16
    %v123 = vpop.permute.xlu0 %122
    %124 = vrot.lane.b32.xlu0 %v33, 16
    %v125 = vpop.permute.xlu0 %124
    %vm126 = vcmp.lt.s32.totalorder %v39, 16
    %v127 = vsel %vm126, %v123, %v125
    %v128 = vsel %vm126, %v125, %v123
    %v129 = vmul.f32 %v128, %v120
    %v130 = vmul.f32 %v127, %v121
    %s131 = sld [smem:[#allocation2 + $0x1]]
    %v132 = vstv %s131
    %v133 = vmul.f32 %v129, %v132
    %v134 = vmul.f32 %v130, %v132
    %v135 = vadd.f32 %v105, %v133
    %v136 = vadd.f32 %v106, %v134
    %s137 = sld [smem:[#allocation2 + $0x1c]]
    %v138 = vstv %s137
    %v139 = vmul.f32 %v129, %v138
    %v140 = vmul.f32 %v130, %v138
    %v141 = vadd.f32 %v111, %v139
    %v142 = vadd.f32 %v112, %v140
    %s143 = sld [smem:[#allocation2 + $0x37]]
    %v144 = vstv %s143
    %v145 = vmul.f32 %v129, %v144
    %v146 = vmul.f32 %v130, %v144
    %v147 = vadd.f32 %v117, %v145
    %v148 = vadd.f32 %v118, %v146
    %149 = vrot.lane.b32.xlu0 %v63, 16
    %v150 = vpop.permute.xlu0 %149
    %151 = vrot.lane.b32.xlu0 %v64, 16
    %v152 = vpop.permute.xlu0 %151
    %v153 = vsel %vm126, %v150, %v152
    %v154 = vsel %vm126, %v152, %v150
    %v155 = vmul.f32 %v154, %v120
    %v156 = vmul.f32 %v153, %v121
    %s157 = sld [smem:[#allocation2 + $0xa]]
    %v158 = vstv %s157
    %v159 = vmul.f32 %v155, %v158
    %v160 = vmul.f32 %v156, %v158
    %v161 = vadd.f32 %v135, %v159
    %v162 = vadd.f32 %v136, %v160
    %s163 = sld [smem:[#allocation2 + $0x25]]
    %v164 = vstv %s163
    %v165 = vmul.f32 %v155, %v164
    %v166 = vmul.f32 %v156, %v164
    %v167 = vadd.f32 %v141, %v165
    %v168 = vadd.f32 %v142, %v166
    %s169 = sld [smem:[#allocation2 + $0x40]]
    %v170 = vstv %s169
    %v171 = vmul.f32 %v155, %v170
    %v172 = vmul.f32 %v156, %v170
    %v173 = vadd.f32 %v147, %v171
    %v174 = vadd.f32 %v148, %v172
    %175 = vrot.lane.b32.xlu0 %v91, 16
    %v176 = vpop.permute.xlu0 %175
    %177 = vrot.lane.b32.xlu0 %v92, 16
    %v178 = vpop.permute.xlu0 %177
    %v179 = vsel %vm126, %v176, %v178
    %v180 = vsel %vm126, %v178, %v176
    %v181 = vmul.f32 %v180, %v120
    %v182 = vmul.f32 %v179, %v121
    %s183 = sld [smem:[#allocation2 + $0x13]]
    %v184 = vstv %s183
    %v185 = vmul.f32 %v181, %v184
    %v186 = vmul.f32 %v182, %v184
    %v187 = vadd.f32 %v161, %v185
    %v188 = vadd.f32 %v162, %v186
    %s189 = sld [smem:[#allocation2 + $0x2e]]
    %v190 = vstv %s189
    %v191 = vmul.f32 %v181, %v190
    %v192 = vmul.f32 %v182, %v190
    %v193 = vadd.f32 %v167, %v191
    %v194 = vadd.f32 %v168, %v192
    %s195 = sld [smem:[#allocation2 + $0x49]]
    %v196 = vstv %s195
    %v197 = vmul.f32 %v181, %v196
    %v198 = vmul.f32 %v182, %v196
    %v199 = vadd.f32 %v173, %v197
    %v200 = vadd.f32 %v174, %v198
    %s201 = scalar_lea.vmem %s1, 32
    %v202 = vld [vmem:[%s201] sm:$0xff]
    %v203 = vld [vmem:[%s201 + $0x8] sm:$0xff]
    %204 = vrot.lane.b32.xlu0 %v32, 15
    %v205 = vpop.permute.xlu0 %204
    %206 = vrot.lane.b32.xlu0 %v33, 15
    %v207 = vpop.permute.xlu0 %206
    %vm208 = vcmp.lt.s32.totalorder %v39, 15
    %v209 = vsel %vm208, %v205, %v207
    %v210 = vsel %vm208, %v207, %v205
    %v211 = vmul.f32 %v210, %v202
    %v212 = vmul.f32 %v209, %v203
    %s213 = sld [smem:[#allocation2 + $0x2]]
    %v214 = vstv %s213
    %v215 = vmul.f32 %v211, %v214
    %v216 = vmul.f32 %v212, %v214
    %v217 = vadd.f32 %v187, %v215
    %v218 = vadd.f32 %v188, %v216
    %s219 = sld [smem:[#allocation2 + $0x1d]]
    %v220 = vstv %s219
    %v221 = vmul.f32 %v211, %v220
    %v222 = vmul.f32 %v212, %v220
    %v223 = vadd.f32 %v193, %v221
    %v224 = vadd.f32 %v194, %v222
    %s225 = sld [smem:[#allocation2 + $0x38]]
    %v226 = vstv %s225
    %v227 = vmul.f32 %v211, %v226
    %v228 = vmul.f32 %v212, %v226
    %v229 = vadd.f32 %v199, %v227
    %v230 = vadd.f32 %v200, %v228
    %231 = vrot.lane.b32.xlu0 %v63, 15
    %v232 = vpop.permute.xlu0 %231
    %233 = vrot.lane.b32.xlu0 %v64, 15
    %v234 = vpop.permute.xlu0 %233
    %v235 = vsel %vm208, %v232, %v234
    %v236 = vsel %vm208, %v234, %v232
    %v237 = vmul.f32 %v236, %v202
    %v238 = vmul.f32 %v235, %v203
    %s239 = sld [smem:[#allocation2 + $0xb]]
    %v240 = vstv %s239
    %v241 = vmul.f32 %v237, %v240
    %v242 = vmul.f32 %v238, %v240
    %v243 = vadd.f32 %v217, %v241
    %v244 = vadd.f32 %v218, %v242
    %s245 = sld [smem:[#allocation2 + $0x26]]
    %v246 = vstv %s245
    %v247 = vmul.f32 %v237, %v246
    %v248 = vmul.f32 %v238, %v246
    %v249 = vadd.f32 %v223, %v247
    %v250 = vadd.f32 %v224, %v248
    %s251 = sld [smem:[#allocation2 + $0x41]]
    %v252 = vstv %s251
    %v253 = vmul.f32 %v237, %v252
    %v254 = vmul.f32 %v238, %v252
    %v255 = vadd.f32 %v229, %v253
    %v256 = vadd.f32 %v230, %v254
    %257 = vrot.lane.b32.xlu0 %v91, 15
    %v258 = vpop.permute.xlu0 %257
    %259 = vrot.lane.b32.xlu0 %v92, 15
    %v260 = vpop.permute.xlu0 %259
    %v261 = vsel %vm208, %v258, %v260
    %v262 = vsel %vm208, %v260, %v258
    %v263 = vmul.f32 %v262, %v202
    %v264 = vmul.f32 %v261, %v203
    %s265 = sld [smem:[#allocation2 + $0x14]]
    %v266 = vstv %s265
    %v267 = vmul.f32 %v263, %v266
    %v268 = vmul.f32 %v264, %v266
    %v269 = vadd.f32 %v243, %v267
    %v270 = vadd.f32 %v244, %v268
    %s271 = sld [smem:[#allocation2 + $0x2f]]
    %v272 = vstv %s271
    %v273 = vmul.f32 %v263, %v272
    %v274 = vmul.f32 %v264, %v272
    %v275 = vadd.f32 %v249, %v273
    %v276 = vadd.f32 %v250, %v274
    %s277 = sld [smem:[#allocation2 + $0x4a]]
    %v278 = vstv %s277
    %v279 = vmul.f32 %v263, %v278
    %v280 = vmul.f32 %v264, %v278
    %v281 = vadd.f32 %v255, %v279
    %v282 = vadd.f32 %v256, %v280
    %s283 = scalar_lea.vmem %s1, 48
    %v284 = vld [vmem:[%s283] sm:$0xff]
    %v285 = vld [vmem:[%s283 + $0x8] sm:$0xff]
    %286 = vrot.lane.b32.xlu0 %v32, 1
    %v287 = vpop.permute.xlu0 %286
    %288 = vrot.lane.b32.xlu0 %v33, 1
    %v289 = vpop.permute.xlu0 %288
    %vm290 = vcmp.lt.s32.totalorder %v39, 1
    %v291 = vsel %vm290, %v287, %v289
    %v292 = vsel %vm290, %v289, %v287
    %v293 = vmul.f32 %v292, %v284
    %v294 = vmul.f32 %v291, %v285
    %s295 = sld [smem:[#allocation2 + $0x3]]
    %v296 = vstv %s295
    %v297 = vmul.f32 %v293, %v296
    %v298 = vmul.f32 %v294, %v296
    %v299 = vadd.f32 %v269, %v297
    %v300 = vadd.f32 %v270, %v298
    %s301 = sld [smem:[#allocation2 + $0x1e]]
    %v302 = vstv %s301
    %v303 = vmul.f32 %v293, %v302
    %v304 = vmul.f32 %v294, %v302
    %v305 = vadd.f32 %v275, %v303
    %v306 = vadd.f32 %v276, %v304
    %s307 = sld [smem:[#allocation2 + $0x39]]
    %v308 = vstv %s307
    %v309 = vmul.f32 %v293, %v308
    %v310 = vmul.f32 %v294, %v308
    %v311 = vadd.f32 %v281, %v309
    %v312 = vadd.f32 %v282, %v310
    %313 = vrot.lane.b32.xlu0 %v63, 1
    %v314 = vpop.permute.xlu0 %313
    %315 = vrot.lane.b32.xlu0 %v64, 1
    %v316 = vpop.permute.xlu0 %315
    %v317 = vsel %vm290, %v314, %v316
    %v318 = vsel %vm290, %v316, %v314
    %v319 = vmul.f32 %v318, %v284
    %v320 = vmul.f32 %v317, %v285
    %s321 = sld [smem:[#allocation2 + $0xc]]
    %v322 = vstv %s321
    %v323 = vmul.f32 %v319, %v322
    %v324 = vmul.f32 %v320, %v322
    %v325 = vadd.f32 %v299, %v323
    %v326 = vadd.f32 %v300, %v324
    %s327 = sld [smem:[#allocation2 + $0x27]]
    %v328 = vstv %s327
    %v329 = vmul.f32 %v319, %v328
    %v330 = vmul.f32 %v320, %v328
    %v331 = vadd.f32 %v305, %v329
    %v332 = vadd.f32 %v306, %v330
    %s333 = sld [smem:[#allocation2 + $0x42]]
    %v334 = vstv %s333
    %v335 = vmul.f32 %v319, %v334
    %v336 = vmul.f32 %v320, %v334
    %v337 = vadd.f32 %v311, %v335
    %v338 = vadd.f32 %v312, %v336
    %339 = vrot.lane.b32.xlu0 %v91, 1
    %v340 = vpop.permute.xlu0 %339
    %341 = vrot.lane.b32.xlu0 %v92, 1
    %v342 = vpop.permute.xlu0 %341
    %v343 = vsel %vm290, %v340, %v342
    %v344 = vsel %vm290, %v342, %v340
    %v345 = vmul.f32 %v344, %v284
    %v346 = vmul.f32 %v343, %v285
    %s347 = sld [smem:[#allocation2 + $0x15]]
    %v348 = vstv %s347
    %v349 = vmul.f32 %v345, %v348
    %v350 = vmul.f32 %v346, %v348
    %v351 = vadd.f32 %v325, %v349
    %v352 = vadd.f32 %v326, %v350
    %s353 = sld [smem:[#allocation2 + $0x30]]
    %v354 = vstv %s353
    %v355 = vmul.f32 %v345, %v354
    %v356 = vmul.f32 %v346, %v354
    %v357 = vadd.f32 %v331, %v355
    %v358 = vadd.f32 %v332, %v356
    %s359 = sld [smem:[#allocation2 + $0x4b]]
    %v360 = vstv %s359
    %v361 = vmul.f32 %v345, %v360
    %v362 = vmul.f32 %v346, %v360
    %v363 = vadd.f32 %v337, %v361
    %v364 = vadd.f32 %v338, %v362
    %s365 = sld [smem:[#allocation2 + $0x4]]
    %v366 = vstv %s365
    %v367 = vmul.f32 %v32, %v366
    %v368 = vmul.f32 %v33, %v366
    %v369 = vadd.f32 %v351, %v367
    %v370 = vadd.f32 %v352, %v368
    %s371 = sld [smem:[#allocation2 + $0x1f]]
    %v372 = vstv %s371
    %v373 = vmul.f32 %v32, %v372
    %v374 = vmul.f32 %v33, %v372
    %v375 = vadd.f32 %v357, %v373
    %v376 = vadd.f32 %v358, %v374
    %s377 = sld [smem:[#allocation2 + $0x3a]]
    %v378 = vstv %s377
    %v379 = vmul.f32 %v32, %v378
    %v380 = vmul.f32 %v33, %v378
    %v381 = vadd.f32 %v363, %v379
    %v382 = vadd.f32 %v364, %v380
    %s383 = sld [smem:[#allocation2 + $0xd]]
    %v384 = vstv %s383
    %v385 = vmul.f32 %v63, %v384
    %v386 = vmul.f32 %v64, %v384
    %v387 = vadd.f32 %v369, %v385
    %v388 = vadd.f32 %v370, %v386
    %s389 = sld [smem:[#allocation2 + $0x28]]
    %v390 = vstv %s389
    %v391 = vmul.f32 %v63, %v390
    %v392 = vmul.f32 %v64, %v390
    %v393 = vadd.f32 %v375, %v391
    %v394 = vadd.f32 %v376, %v392
    %s395 = sld [smem:[#allocation2 + $0x43]]
    %v396 = vstv %s395
    %v397 = vmul.f32 %v63, %v396
    %v398 = vmul.f32 %v64, %v396
    %v399 = vadd.f32 %v381, %v397
    %v400 = vadd.f32 %v382, %v398
    %s401 = sld [smem:[#allocation2 + $0x16]]
    %v402 = vstv %s401
    %v403 = vmul.f32 %v91, %v402
    %v404 = vmul.f32 %v92, %v402
    %v405 = vadd.f32 %v387, %v403
    %v406 = vadd.f32 %v388, %v404
    %s407 = sld [smem:[#allocation2 + $0x31]]
    %v408 = vstv %s407
    %v409 = vmul.f32 %v91, %v408
    %v410 = vmul.f32 %v92, %v408
    %v411 = vadd.f32 %v393, %v409
    %v412 = vadd.f32 %v394, %v410
    %s413 = sld [smem:[#allocation2 + $0x4c]]
    %v414 = vstv %s413
    %v415 = vmul.f32 %v91, %v414
    %v416 = vmul.f32 %v92, %v414
    %v417 = vadd.f32 %v399, %v415
    %v418 = vadd.f32 %v400, %v416
    %s419 = scalar_lea.vmem %s1, 80
    %v420 = vld [vmem:[%s419] sm:$0xff]
    %v421 = vld [vmem:[%s419 + $0x8] sm:$0xff]
    %422 = vrot.lane.b32.xlu0 %v32, 127
    %v423 = vpop.permute.xlu0 %422
    %424 = vrot.lane.b32.xlu0 %v33, 127
    %v425 = vpop.permute.xlu0 %424
    %vm426 = vcmp.lt.s32.totalorder %v39, 127
    %v427 = vsel %vm426, %v423, %v425
    %v428 = vsel %vm426, %v425, %v423
    %v429 = vmul.f32 %v427, %v420
    %v430 = vmul.f32 %v428, %v421
    %s431 = sld [smem:[#allocation2 + $0x5]]
    %v432 = vstv %s431
    %v433 = vmul.f32 %v429, %v432
    %v434 = vmul.f32 %v430, %v432
    %v435 = vadd.f32 %v405, %v433
    %v436 = vadd.f32 %v406, %v434
    %s437 = sld [smem:[#allocation2 + $0x20]]
    %v438 = vstv %s437
    %v439 = vmul.f32 %v429, %v438
    %v440 = vmul.f32 %v430, %v438
    %v441 = vadd.f32 %v411, %v439
    %v442 = vadd.f32 %v412, %v440
    %s443 = sld [smem:[#allocation2 + $0x3b]]
    %v444 = vstv %s443
    %v445 = vmul.f32 %v429, %v444
    %v446 = vmul.f32 %v430, %v444
    %v447 = vadd.f32 %v417, %v445
    %v448 = vadd.f32 %v418, %v446
    %449 = vrot.lane.b32.xlu0 %v63, 127
    %v450 = vpop.permute.xlu0 %449
    %451 = vrot.lane.b32.xlu0 %v64, 127
    %v452 = vpop.permute.xlu0 %451
    %v453 = vsel %vm426, %v450, %v452
    %v454 = vsel %vm426, %v452, %v450
    %v455 = vmul.f32 %v453, %v420
    %v456 = vmul.f32 %v454, %v421
    %s457 = sld [smem:[#allocation2 + $0xe]]
    %v458 = vstv %s457
    %v459 = vmul.f32 %v455, %v458
    %v460 = vmul.f32 %v456, %v458
    %v461 = vadd.f32 %v435, %v459
    %v462 = vadd.f32 %v436, %v460
    %s463 = sld [smem:[#allocation2 + $0x29]]
    %v464 = vstv %s463
    %v465 = vmul.f32 %v455, %v464
    %v466 = vmul.f32 %v456, %v464
    %v467 = vadd.f32 %v441, %v465
    %v468 = vadd.f32 %v442, %v466
    %s469 = sld [smem:[#allocation2 + $0x44]]
    %v470 = vstv %s469
    %v471 = vmul.f32 %v455, %v470
    %v472 = vmul.f32 %v456, %v470
    %v473 = vadd.f32 %v447, %v471
    %v474 = vadd.f32 %v448, %v472
    %475 = vrot.lane.b32.xlu0 %v91, 127
    %v476 = vpop.permute.xlu0 %475
    %477 = vrot.lane.b32.xlu0 %v92, 127
    %v478 = vpop.permute.xlu0 %477
    %v479 = vsel %vm426, %v476, %v478
    %v480 = vsel %vm426, %v478, %v476
    %v481 = vmul.f32 %v479, %v420
    %v482 = vmul.f32 %v480, %v421
    %s483 = sld [smem:[#allocation2 + $0x17]]
    %v484 = vstv %s483
    %v485 = vmul.f32 %v481, %v484
    %v486 = vmul.f32 %v482, %v484
    %v487 = vadd.f32 %v461, %v485
    %v488 = vadd.f32 %v462, %v486
    %s489 = sld [smem:[#allocation2 + $0x32]]
    %v490 = vstv %s489
    %v491 = vmul.f32 %v481, %v490
    %v492 = vmul.f32 %v482, %v490
    %v493 = vadd.f32 %v467, %v491
    %v494 = vadd.f32 %v468, %v492
    %s495 = sld [smem:[#allocation2 + $0x4d]]
    %v496 = vstv %s495
    %v497 = vmul.f32 %v481, %v496
    %v498 = vmul.f32 %v482, %v496
    %v499 = vadd.f32 %v473, %v497
    %v500 = vadd.f32 %v474, %v498
    %s501 = scalar_lea.vmem %s1, 96
    %v502 = vld [vmem:[%s501] sm:$0xff]
    %v503 = vld [vmem:[%s501 + $0x8] sm:$0xff]
    %504 = vrot.lane.b32.xlu0 %v32, 113
    %v505 = vpop.permute.xlu0 %504
    %506 = vrot.lane.b32.xlu0 %v33, 113
    %v507 = vpop.permute.xlu0 %506
    %vm508 = vcmp.lt.s32.totalorder %v39, 113
    %v509 = vsel %vm508, %v505, %v507
    %v510 = vsel %vm508, %v507, %v505
    %v511 = vmul.f32 %v509, %v502
    %v512 = vmul.f32 %v510, %v503
    %s513 = sld [smem:[#allocation2 + $0x6]]
    %v514 = vstv %s513
    %v515 = vmul.f32 %v511, %v514
    %v516 = vmul.f32 %v512, %v514
    %v517 = vadd.f32 %v487, %v515
    %v518 = vadd.f32 %v488, %v516
    %s519 = sld [smem:[#allocation2 + $0x21]]
    %v520 = vstv %s519
    %v521 = vmul.f32 %v511, %v520
    %v522 = vmul.f32 %v512, %v520
    %v523 = vadd.f32 %v493, %v521
    %v524 = vadd.f32 %v494, %v522
    %s525 = sld [smem:[#allocation2 + $0x3c]]
    %v526 = vstv %s525
    %v527 = vmul.f32 %v511, %v526
    %v528 = vmul.f32 %v512, %v526
    %v529 = vadd.f32 %v499, %v527
    %v530 = vadd.f32 %v500, %v528
    %531 = vrot.lane.b32.xlu0 %v63, 113
    %v532 = vpop.permute.xlu0 %531
    %533 = vrot.lane.b32.xlu0 %v64, 113
    %v534 = vpop.permute.xlu0 %533
    %v535 = vsel %vm508, %v532, %v534
    %v536 = vsel %vm508, %v534, %v532
    %v537 = vmul.f32 %v535, %v502
    %v538 = vmul.f32 %v536, %v503
    %s539 = sld [smem:[#allocation2 + $0xf]]
    %v540 = vstv %s539
    %v541 = vmul.f32 %v537, %v540
    %v542 = vmul.f32 %v538, %v540
    %v543 = vadd.f32 %v517, %v541
    %v544 = vadd.f32 %v518, %v542
    %s545 = sld [smem:[#allocation2 + $0x2a]]
    %v546 = vstv %s545
    %v547 = vmul.f32 %v537, %v546
    %v548 = vmul.f32 %v538, %v546
    %v549 = vadd.f32 %v523, %v547
    %v550 = vadd.f32 %v524, %v548
    %s551 = sld [smem:[#allocation2 + $0x45]]
    %v552 = vstv %s551
    %v553 = vmul.f32 %v537, %v552
    %v554 = vmul.f32 %v538, %v552
    %v555 = vadd.f32 %v529, %v553
    %v556 = vadd.f32 %v530, %v554
    %557 = vrot.lane.b32.xlu0 %v91, 113
    %v558 = vpop.permute.xlu0 %557
    %559 = vrot.lane.b32.xlu0 %v92, 113
    %v560 = vpop.permute.xlu0 %559
    %v561 = vsel %vm508, %v558, %v560
    %v562 = vsel %vm508, %v560, %v558
    %v563 = vmul.f32 %v561, %v502
    %v564 = vmul.f32 %v562, %v503
    %s565 = sld [smem:[#allocation2 + $0x18]]
    %v566 = vstv %s565
    %v567 = vmul.f32 %v563, %v566
    %v568 = vmul.f32 %v564, %v566
    %v569 = vadd.f32 %v543, %v567
    %v570 = vadd.f32 %v544, %v568
    %s571 = sld [smem:[#allocation2 + $0x33]]
    %v572 = vstv %s571
    %v573 = vmul.f32 %v563, %v572
    %v574 = vmul.f32 %v564, %v572
    %v575 = vadd.f32 %v549, %v573
    %v576 = vadd.f32 %v550, %v574
    %s577 = sld [smem:[#allocation2 + $0x4e]]
    %v578 = vstv %s577
    %v579 = vmul.f32 %v563, %v578
    %v580 = vmul.f32 %v564, %v578
    %v581 = vadd.f32 %v555, %v579
    %v582 = vadd.f32 %v556, %v580
    %s583 = scalar_lea.vmem %s1, 112
    %v584 = vld [vmem:[%s583] sm:$0xff]
    %v585 = vld [vmem:[%s583 + $0x8] sm:$0xff]
    %586 = vrot.lane.b32.xlu0 %v32, 112
    %v587 = vpop.permute.xlu0 %586
    %588 = vrot.lane.b32.xlu0 %v33, 112
    %v589 = vpop.permute.xlu0 %588
    %vm590 = vcmp.lt.s32.totalorder %v39, 112
    %v591 = vsel %vm590, %v587, %v589
    %v592 = vsel %vm590, %v589, %v587
    %v593 = vmul.f32 %v591, %v584
    %v594 = vmul.f32 %v592, %v585
    %s595 = sld [smem:[#allocation2 + $0x7]]
    %v596 = vstv %s595
    %v597 = vmul.f32 %v593, %v596
    %v598 = vmul.f32 %v594, %v596
    %v599 = vadd.f32 %v569, %v597
    %v600 = vadd.f32 %v570, %v598
    %s601 = sld [smem:[#allocation2 + $0x22]]
    %v602 = vstv %s601
    %v603 = vmul.f32 %v593, %v602
    %v604 = vmul.f32 %v594, %v602
    %v605 = vadd.f32 %v575, %v603
    %v606 = vadd.f32 %v576, %v604
    %s607 = sld [smem:[#allocation2 + $0x3d]]
    %v608 = vstv %s607
    %v609 = vmul.f32 %v593, %v608
    %v610 = vmul.f32 %v594, %v608
    %v611 = vadd.f32 %v581, %v609
    %v612 = vadd.f32 %v582, %v610
    %613 = vrot.lane.b32.xlu0 %v63, 112
    %v614 = vpop.permute.xlu0 %613
    %615 = vrot.lane.b32.xlu0 %v64, 112
    %v616 = vpop.permute.xlu0 %615
    %v617 = vsel %vm590, %v614, %v616
    %v618 = vsel %vm590, %v616, %v614
    %v619 = vmul.f32 %v617, %v584
    %v620 = vmul.f32 %v618, %v585
    %s621 = sld [smem:[#allocation2 + $0x10]]
    %v622 = vstv %s621
    %v623 = vmul.f32 %v619, %v622
    %v624 = vmul.f32 %v620, %v622
    %v625 = vadd.f32 %v599, %v623
    %v626 = vadd.f32 %v600, %v624
    %s627 = sld [smem:[#allocation2 + $0x2b]]
    %v628 = vstv %s627
    %v629 = vmul.f32 %v619, %v628
    %v630 = vmul.f32 %v620, %v628
    %v631 = vadd.f32 %v605, %v629
    %v632 = vadd.f32 %v606, %v630
    %s633 = sld [smem:[#allocation2 + $0x46]]
    %v634 = vstv %s633
    %v635 = vmul.f32 %v619, %v634
    %v636 = vmul.f32 %v620, %v634
    %v637 = vadd.f32 %v611, %v635
    %v638 = vadd.f32 %v612, %v636
    %639 = vrot.lane.b32.xlu0 %v91, 112
    %v640 = vpop.permute.xlu0 %639
    %641 = vrot.lane.b32.xlu0 %v92, 112
    %v642 = vpop.permute.xlu0 %641
    %v643 = vsel %vm590, %v640, %v642
    %v644 = vsel %vm590, %v642, %v640
    %v645 = vmul.f32 %v643, %v584
    %v646 = vmul.f32 %v644, %v585
    %s647 = sld [smem:[#allocation2 + $0x19]]
    %v648 = vstv %s647
    %v649 = vmul.f32 %v645, %v648
    %v650 = vmul.f32 %v646, %v648
    %v651 = vadd.f32 %v625, %v649
    %v652 = vadd.f32 %v626, %v650
    %s653 = sld [smem:[#allocation2 + $0x34]]
    %v654 = vstv %s653
    %v655 = vmul.f32 %v645, %v654
    %v656 = vmul.f32 %v646, %v654
    %v657 = vadd.f32 %v631, %v655
    %v658 = vadd.f32 %v632, %v656
    %s659 = sld [smem:[#allocation2 + $0x4f]]
    %v660 = vstv %s659
    %v661 = vmul.f32 %v645, %v660
    %v662 = vmul.f32 %v646, %v660
    %v663 = vadd.f32 %v637, %v661
    %v664 = vadd.f32 %v638, %v662
    %s665 = scalar_lea.vmem %s1, 128
    %v666 = vld [vmem:[%s665] sm:$0xff]
    %v667 = vld [vmem:[%s665 + $0x8] sm:$0xff]
    %668 = vrot.lane.b32.xlu0 %v32, 111
    %v669 = vpop.permute.xlu0 %668
    %670 = vrot.lane.b32.xlu0 %v33, 111
    %v671 = vpop.permute.xlu0 %670
    %vm672 = vcmp.lt.s32.totalorder %v39, 111
    %v673 = vsel %vm672, %v669, %v671
    %v674 = vsel %vm672, %v671, %v669
    %v675 = vmul.f32 %v673, %v666
    %v676 = vmul.f32 %v674, %v667
    %s677 = sld [smem:[#allocation2 + $0x8]]
    %v678 = vstv %s677
    %v679 = vmul.f32 %v675, %v678
    %v680 = vmul.f32 %v676, %v678
    %v681 = vadd.f32 %v651, %v679
    %v682 = vadd.f32 %v652, %v680
    %s683 = sld [smem:[#allocation2 + $0x23]]
    %v684 = vstv %s683
    %v685 = vmul.f32 %v675, %v684
    %v686 = vmul.f32 %v676, %v684
    %v687 = vadd.f32 %v657, %v685
    %v688 = vadd.f32 %v658, %v686
    %s689 = sld [smem:[#allocation2 + $0x3e]]
    %v690 = vstv %s689
    %v691 = vmul.f32 %v675, %v690
    %v692 = vmul.f32 %v676, %v690
    %v693 = vadd.f32 %v663, %v691
    %v694 = vadd.f32 %v664, %v692
    %695 = vrot.lane.b32.xlu0 %v63, 111
    %v696 = vpop.permute.xlu0 %695
    %697 = vrot.lane.b32.xlu0 %v64, 111
    %v698 = vpop.permute.xlu0 %697
    %v699 = vsel %vm672, %v696, %v698
    %v700 = vsel %vm672, %v698, %v696
    %v701 = vmul.f32 %v699, %v666
    %v702 = vmul.f32 %v700, %v667
    %s703 = sld [smem:[#allocation2 + $0x11]]
    %v704 = vstv %s703
    %v705 = vmul.f32 %v701, %v704
    %v706 = vmul.f32 %v702, %v704
    %v707 = vadd.f32 %v681, %v705
    %v708 = vadd.f32 %v682, %v706
    %s709 = sld [smem:[#allocation2 + $0x2c]]
    %v710 = vstv %s709
    %v711 = vmul.f32 %v701, %v710
    %v712 = vmul.f32 %v702, %v710
    %v713 = vadd.f32 %v687, %v711
    %v714 = vadd.f32 %v688, %v712
    %s715 = sld [smem:[#allocation2 + $0x47]]
    %v716 = vstv %s715
    %v717 = vmul.f32 %v701, %v716
    %v718 = vmul.f32 %v702, %v716
    %v719 = vadd.f32 %v693, %v717
    %v720 = vadd.f32 %v694, %v718
    %721 = vrot.lane.b32.xlu0 %v91, 111
    %v722 = vpop.permute.xlu0 %721
    %723 = vrot.lane.b32.xlu0 %v92, 111
    %v724 = vpop.permute.xlu0 %723
    %v725 = vsel %vm672, %v722, %v724
    %v726 = vsel %vm672, %v724, %v722
    %v727 = vmul.f32 %v725, %v666
    %v728 = vmul.f32 %v726, %v667
    %s729 = sld [smem:[#allocation2 + $0x1a]]
    %v730 = vstv %s729
    %v731 = vmul.f32 %v727, %v730
    %v732 = vmul.f32 %v728, %v730
    %v733 = vadd.f32 %v707, %v731
    %v734 = vadd.f32 %v708, %v732
    %s735 = sld [smem:[#allocation2 + $0x35]]
    %v736 = vstv %s735
    %v737 = vmul.f32 %v727, %v736
    %v738 = vmul.f32 %v728, %v736
    %v739 = vadd.f32 %v713, %v737
    %v740 = vadd.f32 %v714, %v738
    %s741 = sld [smem:[#allocation2 + $0x50]]
    %v742 = vstv %s741
    %v743 = vmul.f32 %v727, %v742
    %v744 = vmul.f32 %v728, %v742
    %v745 = vadd.f32 %v719, %v743
    %v746 = vadd.f32 %v720, %v744
    %s747 = smul.addr %s29, 8
    %s748 = scalar_lea.vmem %s3, %s747
    %749 = vst [vmem:[%s748] sm:$0xff] %v733
    %750 = vst [vmem:[%s748 + $0x8] sm:$0xff] %v734
    %751 = vst [vmem:[%s748 + $0x10] sm:$0xff] %v739
    %752 = vst [vmem:[%s748 + $0x18] sm:$0xff] %v740
    %753 = vst [vmem:[%s748 + $0x20] sm:$0xff] %v745
    %754 = vst [vmem:[%s748 + $0x28] sm:$0xff] %v746
    // Predicated region
    $region18: #{client_net_forward.1} parent=1 // pred_check
      _
    $region19: #{client_net_forward.1} parent=1 // pred_check_branch
      %756 = sbr.rel (0) target = $region21
    $region20: #{client_net_forward.1} parent=1 // pred_region
      _
    $region21: #{client_net_forward.1} parent=1 // pred_fallthru
      _
    // Predicated region
    $region22: #{client_net_forward.1} parent=1 // pred_check
      _
    $region23: #{client_net_forward.1} parent=1 // pred_check_branch
      %758 = sbr.rel (0) target = $region25
    $region24: #{client_net_forward.1} parent=1 // pred_region
      _
    $region25: #{client_net_forward.1} parent=1 // pred_fallthru
      _
    %759 = vsyncpa [#allocation3], 1

</llo_original>
